<compile_context>
chip_gen: v5e
topology: v5e:2x2
jax: 0.10.0
libtpu: 0.0.40
codegen_flags: <defaults>
</compile_context>

<pallas_src>
import functools
import math
from typing import NamedTuple

import jax
import jax.numpy as jnp
from jax.experimental import pallas as pl
from jax.experimental.pallas import tpu as pltpu


def _round_up(x, m):
    return ((x + m - 1) // m) * m


def _physical_vmem_bytes():
    """Physical per-core VMEM; conservative fallback if the query fails."""
    try:
        info = pltpu.get_tpu_info()
        cap = getattr(info, "vmem_capacity_bytes", None)
        if cap:
            return int(cap)
    except Exception:
        pass
    return 64 << 20  # v7x per-TC budget: safe lower bound on every generation


class SGLUWeights(NamedTuple):
    wuv: jax.Array   # (d_in_p, nk * 2*tk); k-th block of width 2*tk is [Wu_k | Wv_k]
    wo: jax.Array    # (mlp_p, d_out_p)
    d_in: int
    mlp_dim: int
    d_out: int
    d_in_p: int
    d_out_p: int
    tk: int


def prepare_sglu_weights(wu, wv, wo, *, tk=None, compute_dtype=jnp.bfloat16,
                         lane_align=128):
    """Pad / pack SGLU weights ONCE (hoisted out of the per-call path).

    wu/wv: (d_in, mlp_dim) stored as (in, out) == PyTorch weight transposed.
    wo: (mlp_dim, d_out).  Zero padding is exact for the forward pass.
    """
    d_in, mlp_dim = wu.shape
    assert wv.shape == wu.shape and wo.shape[0] == mlp_dim
    d_out = wo.shape[1]

    if compute_dtype is not None:
        wu = wu.astype(compute_dtype)
        wv = wv.astype(compute_dtype)
        wo = wo.astype(compute_dtype)

    if tk is None:
        # 128 MiB parts (v5e/v6e): 512-wide mlp chunk; 64 MiB v7x: 256.
        tk = 512 if _physical_vmem_bytes() >= (96 << 20) else 256
    tk = min(tk, _round_up(mlp_dim, 128))

    d_in_p = _round_up(d_in, lane_align)
    d_out_p = _round_up(d_out, lane_align)
    mlp_p = _round_up(mlp_dim, tk)
    nk = mlp_p // tk

    wu_p = jnp.pad(wu, ((0, d_in_p - d_in), (0, mlp_p - mlp_dim)))
    wv_p = jnp.pad(wv, ((0, d_in_p - d_in), (0, mlp_p - mlp_dim)))
    wo_p = jnp.pad(wo, ((0, mlp_p - mlp_dim), (0, d_out_p - d_out)))

    # Interleave per mlp-chunk: block k along the last axis is [Wu_k | Wv_k].
    wuv = jnp.concatenate(
        [wu_p.reshape(d_in_p, nk, tk), wv_p.reshape(d_in_p, nk, tk)], axis=-1
    ).reshape(d_in_p, nk * 2 * tk)

    return SGLUWeights(wuv=wuv, wo=wo_p, d_in=d_in, mlp_dim=mlp_dim,
                       d_out=d_out, d_in_p=d_in_p, d_out_p=d_out_p, tk=tk)


def _sglu_kernel(x_ref, wuv_ref, wo_ref, o_ref, acc_ref, *, tk):
    """One (row-tile i, mlp-chunk k) step of ((x@Wu) * (x@Wv)) @ Wo.

    The mlp axis (grid axis 1) is a reduction: each chunk's gated product is
    projected through its Wo slice and accumulated in f32 scratch.
    """
    k = pl.program_id(1)

    @pl.when(k == 0)
    def _():
        acc_ref[...] = jnp.zeros_like(acc_ref)

    # One wide in-projection: (tm, d_in_p) @ (d_in_p, 2*tk) -> (tm, 2*tk).
    uv = jnp.dot(x_ref[...], wuv_ref[...], preferred_element_type=jnp.float32)
    u = uv[:, :tk]
    v = uv[:, tk:]
    h = (u * v).astype(wo_ref.dtype)   # gate in f32, cast back for the MXU
    acc_ref[...] += jnp.dot(h, wo_ref[...], preferred_element_type=jnp.float32)

    @pl.when(k == pl.num_programs(1) - 1)
    def _():
        o_ref[...] = acc_ref[...].astype(o_ref.dtype)


def sglu_pallas(x, weights: SGLUWeights, *, tm=512):
    """x: (B, N, d_in).  Returns (B, N, d_out) in x's dtype."""
    B, N, d_in = x.shape
    assert d_in == weights.d_in
    out_dtype = x.dtype
    cdt = weights.wuv.dtype
    x = x.astype(cdt)

    M = B * N
    tm_eff = min(tm, _round_up(M, 8))
    M_p = _round_up(M, tm_eff)
    d_in_p, d_out_p, tk = weights.d_in_p, weights.d_out_p, weights.tk
    mlp_p = weights.wo.shape[0]
    nk = mlp_p // tk

    # Only the activation is padded per call; weights were pre-packed.
    x2p = jnp.pad(x.reshape(M, d_in), ((0, M_p - M), (0, d_in_p - d_in)))

    grid = (M_p // tm_eff, nk)

    w_item = jnp.dtype(cdt).itemsize
    out_item = jnp.dtype(out_dtype).itemsize

    # Advisory cost (true, unpadded work).
    flops = 2 * M * d_in * weights.mlp_dim * 2 + 2 * M * weights.mlp_dim * weights.d_out
    bytes_accessed = (
        (M * d_in + 2 * d_in * weights.mlp_dim + weights.mlp_dim * weights.d_out) * w_item
        + M * weights.d_out * out_item
    )
    cost = pl.CostEstimate(flops=int(flops), transcendentals=0,
                           bytes_accessed=int(bytes_accessed))

    # VMEM working set: double-buffered weight/activation/output tiles + f32 acc.
    vmem_est = (
        2 * w_item * (d_in_p * 2 * tk + tk * d_out_p)   # Wuv + Wo tiles (2-deep)
        + 2 * w_item * tm_eff * d_in_p                  # x tile
        + 2 * out_item * tm_eff * d_out_p               # out tile
        + 4 * tm_eff * d_out_p                          # f32 accumulator
    )
    phys = _physical_vmem_bytes()
    vmem_limit = int(max(32 << 20, min(vmem_est + (8 << 20), phys - (8 << 20))))

    kernel = functools.partial(_sglu_kernel, tk=tk)

    out2 = pl.pallas_call(
        kernel,
        out_shape=jax.ShapeDtypeStruct((M_p, d_out_p), out_dtype),
        grid_spec=pltpu.PrefetchScalarGridSpec(
            num_scalar_prefetch=0,
            grid=grid,
            in_specs=[
                pl.BlockSpec((tm_eff, d_in_p), lambda i, k: (i, 0)),    # x row tile
                pl.BlockSpec((d_in_p, 2 * tk), lambda i, k: (0, k)),    # [Wu_k | Wv_k]
                pl.BlockSpec((tk, d_out_p), lambda i, k: (k, 0)),       # Wo chunk
            ],
            out_specs=pl.BlockSpec((tm_eff, d_out_p), lambda i, k: (i, 0)),
            scratch_shapes=[pltpu.VMEM((tm_eff, d_out_p), jnp.float32)],
        ),
        compiler_params=pltpu.CompilerParams(
            dimension_semantics=("parallel", "arbitrary"),
            vmem_limit_bytes=vmem_limit,
        ),
        cost_estimate=cost,
    )(x2p, weights.wuv, weights.wo)

    return out2[:M, :weights.d_out].reshape(B, N, weights.d_out)


def init_params(key, d_in, mlp_dim, d_out, dtype=jnp.float32):
    """Deterministic init mimicking nn.Linear's uniform(-1/sqrt(fan_in), ...)."""
    k1, k2, k3 = jax.random.split(key, 3)
    bu = 1.0 / math.sqrt(d_in)
    bo = 1.0 / math.sqrt(mlp_dim)
    # Stored as (in, out) == transposed PyTorch weight.
    wu = jax.random.uniform(k1, (d_in, mlp_dim), dtype, minval=-bu, maxval=bu)
    wv = jax.random.uniform(k2, (d_in, mlp_dim), dtype, minval=-bu, maxval=bu)
    wo = jax.random.uniform(k3, (mlp_dim, d_out), dtype, minval=-bo, maxval=bo)
    return wu, wv, wo


def sglu_ref(x, wu, wv, wo):
    u = jnp.einsum("bnd,dm->bnm", x, wu)
    v = jnp.einsum("bnd,dm->bnm", x, wv)
    return jnp.einsum("bnm,mo->bno", u * v, wo)


if __name__ == "__main__":
    # Small shapes consistent with the module defaults.
    B, N = 2, 8
    d_in, mlp_dim, d_out = 64, 256, 64

    key = jax.random.PRNGKey(0)
    kx, kp = jax.random.split(key)
    x = jax.random.normal(kx, (B, N, d_in), jnp.float32)
    wu, wv, wo = init_params(kp, d_in, mlp_dim, d_out)

    ref = sglu_ref(x, wu, wv, wo)

    # f32 path: exact structural check.
    packed_f32 = prepare_sglu_weights(wu, wv, wo, compute_dtype=None)
    out_f32 = jax.block_until_ready(sglu_pallas(x, packed_f32))
    assert out_f32.shape == (B, N, d_out)
    assert jnp.allclose(out_f32, ref, atol=1e-4, rtol=1e-4), "f32 mismatch vs reference"

    # bf16 path (default perf path): looser tolerance for bf16 operand rounding.
    packed_bf16 = prepare_sglu_weights(wu, wv, wo)  # compute_dtype=bf16
    out_bf16 = jax.block_until_ready(sglu_pallas(x, packed_bf16))
    assert out_bf16.shape == (B, N, d_out)
    assert jnp.allclose(out_bf16, ref, atol=5e-2, rtol=5e-2), "bf16 mismatch vs reference"

    print("KERNEL_OK")
</pallas_src>

<mosaic_0001>
module attributes {stable_mosaic.version = 11 : i64} {
  func.func @_sglu_kernel(%arg0: i32, %arg1: i32, %arg2: memref<16x128xf32, #tpu.memory_space<vmem>>, %arg3: memref<128x512xf32, #tpu.memory_space<vmem>>, %arg4: memref<256x128xf32, #tpu.memory_space<vmem>>, %arg5: memref<16x128xf32, #tpu.memory_space<vmem>>, %arg6: memref<16x128xf32, #tpu.memory_space<vmem>>) attributes {dimension_semantics = [#tpu.dimension_semantics<parallel>, #tpu.dimension_semantics<arbitrary>], iteration_bounds = array<i64: 1, 1>, scalar_prefetch = 0 : i64, scratch_operands = 1 : i64, tpu.core_type = #tpu.core_type<tc>, window_params = [{transform_indices = @transform_0, window_bounds = array<i64: 16, 128>}, {transform_indices = @transform_1, window_bounds = array<i64: 128, 512>}, {transform_indices = @transform_2, window_bounds = array<i64: 256, 128>}, {transform_indices = @transform_3, window_bounds = array<i64: 16, 128>}]} {
    %c0_i32 = arith.constant 0 : i32
    %0 = arith.cmpi eq, %arg1, %c0_i32 : i32
    %1 = arith.extui %0 : i1 to i32
    %c0_i32_0 = arith.constant 0 : i32
    %2 = arith.cmpi ne, %1, %c0_i32_0 : i32
    scf.if %2 {
      %cst_13 = arith.constant 0.000000e+00 : f32
      %17 = vector.broadcast %cst_13 : f32 to vector<16x128xf32>
      %c0_14 = arith.constant 0 : index
      %c0_15 = arith.constant 0 : index
      %18 = vector.load %arg6[%c0_14, %c0_15] : memref<16x128xf32, #tpu.memory_space<vmem>>, vector<16x128xf32>
      tpu.vector_store %arg6[%c0_14, %c0_15], %17 {strides = array<i32>} : memref<16x128xf32, #tpu.memory_space<vmem>>, vector<16x128xf32>,
    } else {
    }
    %c0 = arith.constant 0 : index
    %c0_1 = arith.constant 0 : index
    %3 = vector.load %arg2[%c0, %c0_1] : memref<16x128xf32, #tpu.memory_space<vmem>>, vector<16x128xf32>
    %c0_2 = arith.constant 0 : index
    %c0_3 = arith.constant 0 : index
    %4 = vector.load %arg3[%c0_2, %c0_3] : memref<128x512xf32, #tpu.memory_space<vmem>>, vector<128x512xf32>
    %cst = arith.constant dense<0.000000e+00> : vector<16x512xf32>
    %5 = tpu.matmul %3, %4, %cst {dimension_numbers = #tpu.dot_dimension_numbers<[1], [0], [0], [1], [0, 0, 1, 1], [], []>} : vector<16x128xf32>, vector<128x512xf32>, vector<16x512xf32> -> vector<16x512xf32>
    %6 = vector.extract_strided_slice %5 {offsets = [0, 0], sizes = [16, 256], strides = [1, 1]} : vector<16x512xf32> to vector<16x256xf32>
    %7 = vector.extract_strided_slice %5 {offsets = [0, 256], sizes = [16, 256], strides = [1, 1]} : vector<16x512xf32> to vector<16x256xf32>
    %8 = arith.mulf %6, %7 : vector<16x256xf32>
    %c0_4 = arith.constant 0 : index
    %c0_5 = arith.constant 0 : index
    %9 = vector.load %arg6[%c0_4, %c0_5] : memref<16x128xf32, #tpu.memory_space<vmem>>, vector<16x128xf32>
    %c0_6 = arith.constant 0 : index
    %c0_7 = arith.constant 0 : index
    %10 = vector.load %arg4[%c0_6, %c0_7] : memref<256x128xf32, #tpu.memory_space<vmem>>, vector<256x128xf32>
    %cst_8 = arith.constant dense<0.000000e+00> : vector<16x128xf32>
    %11 = tpu.matmul %8, %10, %cst_8 {dimension_numbers = #tpu.dot_dimension_numbers<[1], [0], [0], [1], [0, 0, 1, 1], [], []>} : vector<16x256xf32>, vector<256x128xf32>, vector<16x128xf32> -> vector<16x128xf32>
    %12 = arith.addf %9, %11 : vector<16x128xf32>
    %c0_9 = arith.constant 0 : index
    %c0_10 = arith.constant 0 : index
    %13 = vector.load %arg6[%c0_9, %c0_10] : memref<16x128xf32, #tpu.memory_space<vmem>>, vector<16x128xf32>
    tpu.vector_store %arg6[%c0_9, %c0_10], %12 {strides = array<i32>} : memref<16x128xf32, #tpu.memory_space<vmem>>, vector<16x128xf32>,
    %c0_i32_11 = arith.constant 0 : i32
    %14 = arith.cmpi eq, %arg1, %c0_i32_11 : i32
    %15 = arith.extui %14 : i1 to i32
    %c0_i32_12 = arith.constant 0 : i32
    %16 = arith.cmpi ne, %15, %c0_i32_12 : i32
    scf.if %16 {
      %c0_13 = arith.constant 0 : index
      %c0_14 = arith.constant 0 : index
      %17 = vector.load %arg6[%c0_13, %c0_14] : memref<16x128xf32, #tpu.memory_space<vmem>>, vector<16x128xf32>
      %c0_15 = arith.constant 0 : index
      %c0_16 = arith.constant 0 : index
      %18 = vector.load %arg5[%c0_15, %c0_16] : memref<16x128xf32, #tpu.memory_space<vmem>>, vector<16x128xf32>
      tpu.vector_store %arg5[%c0_15, %c0_16], %17 {strides = array<i32>} : memref<16x128xf32, #tpu.memory_space<vmem>>, vector<16x128xf32>,
    } else {
    }
    return
  }
  func.func @transform_0(%arg0: i32, %arg1: i32) -> (i32, i32) {
    %c0_i32 = arith.constant 0 : i32
    %c0_i32_0 = arith.constant 0 : i32
    return %arg0, %c0_i32 : i32, i32
  }
  func.func @transform_1(%arg0: i32, %arg1: i32) -> (i32, i32) {
    %c0_i32 = arith.constant 0 : i32
    %c0_i32_0 = arith.constant 0 : i32
    return %c0_i32, %arg1 : i32, i32
  }
  func.func @transform_2(%arg0: i32, %arg1: i32) -> (i32, i32) {
    %c0_i32 = arith.constant 0 : i32
    %c0_i32_0 = arith.constant 0 : i32
    return %arg1, %c0_i32 : i32, i32
  }
  func.func @transform_3(%arg0: i32, %arg1: i32) -> (i32, i32) {
    %c0_i32 = arith.constant 0 : i32
    %c0_i32_0 = arith.constant 0 : i32
    return %arg0, %c0_i32 : i32, i32
  }
}

</mosaic_0001>

<llo_original>
// kernel: tpu_custom_call.1
$region0: #{tpu_custom_call.1}
  #allocation0 [shape = 'u32[]', space=smem, size = 0x4, offset = 0x4, fixed_abs, tag = 'smem constant byte address 0x4 - core index']
  #allocation1 [shape = 'u32[72,128]{1,0:T(1,128)}', space=vmem, size = 0x9000, scoped, tag = 'internal scratch']
  #allocation2 [shape = 'f32[16,128]{1,0:T(8,128)}', space=vmem, size = 0x2000, scoped, tag = 'scratch operand']
  %s0 = inlined_call_operand.hbm [shape: f32[16,128], index: 0, kind: input, shape index: {}]
  %s1 = inlined_call_operand.hbm [shape: f32[128,512], index: 1, kind: input, shape index: {}]
  %s2 = inlined_call_operand.hbm [shape: f32[256,128], index: 2, kind: input, shape index: {}]
  %s3 = inlined_call_operand.hbm [shape: f32[16,128], index: 3, kind: output, shape index: {}]
  %s4 = sld [smem:[#allocation0]]
  $region42: #{tpu_custom_call.1} parent=0
    _
  %s6 = ssub.s32 1, %s4
  %s7 = scalar_select 0, %s6, %s4
  $region1: #{tpu_custom_call.1} parent=0
    #allocation3 [shape = 'u8[8192]{0}', space=vmem, size = 0x2000, scoped, tag = 'input window, operand 0, single buffered']
    #allocation4 [shape = 's32[1]{0}', space=sflag, size = 0x4, scoped, tag = 'scoped memory for tpu_custom_call.1']
    #allocation5 [shape = 's32[1]{0}', space=sflag, size = 0x4, scoped, tag = 'scoped memory for tpu_custom_call.1']
    #allocation6 [shape = 'u8[262144]{0}', space=vmem, size = 0x40000, scoped, tag = 'input window, operand 1, single buffered']
    #allocation7 [shape = 's32[1]{0}', space=sflag, size = 0x4, scoped, tag = 'scoped memory for tpu_custom_call.1']
    #allocation8 [shape = 'u8[131072]{0}', space=vmem, size = 0x20000, scoped, tag = 'input window, operand 2, single buffered']
    #allocation9 [shape = 'u8[8192]{0}', space=vmem, size = 0x2000, scoped, tag = 'output window, operand 0, single buffered']
    %8 = vsyncpa [#allocation4], 0
    %9 = vsyncpa [#allocation7], 0
    %10 = vsyncpa [#allocation5], 0
    // Predicated region
    $region2: #{tpu_custom_call.1} parent=1 // pred_check
      _
    $region3: #{tpu_custom_call.1} parent=1 // pred_check_branch
      %12 = sbr.rel (0) target = $region5
    $region4: #{tpu_custom_call.1} parent=1 // pred_region
      %14 = vsyncadd [#allocation4], 0
      %s15 = sshll.u32 %s0, 4
      %s16 = int_to_ptr.hbm [resolvable:$true] %s15
      %s17 = sshll.u32 [#allocation3], 4
      %s18 = int_to_ptr.vmem [resolvable:$true] %s17
      %23 = dma.hbm_to_vmem [thread:$0]  %s16, 256, %s18, [#allocation4], 128, 128, 8
    $region5: #{tpu_custom_call.1} parent=1 // pred_fallthru
      _
    // Predicated region
    $region6: #{tpu_custom_call.1} parent=1 // pred_check
      _
    $region7: #{tpu_custom_call.1} parent=1 // pred_check_branch
      %25 = sbr.rel (0) target = $region9
    $region8: #{tpu_custom_call.1} parent=1 // pred_region
      %27 = vsyncadd [#allocation7], 0
      %s28 = sshll.u32 %s1, 4
      %s29 = int_to_ptr.hbm [resolvable:$true] %s28
      %s30 = sshll.u32 [#allocation6], 4
      %s31 = int_to_ptr.vmem [resolvable:$true] %s30
      %36 = dma.hbm_to_vmem [thread:$0]  %s29, 8192, %s31, [#allocation7], 512, 512, 32
    $region9: #{tpu_custom_call.1} parent=1 // pred_fallthru
      _
    // Predicated region
    $region10: #{tpu_custom_call.1} parent=1 // pred_check
      _
    $region11: #{tpu_custom_call.1} parent=1 // pred_check_branch
      %38 = sbr.rel (0) target = $region13
    $region12: #{tpu_custom_call.1} parent=1 // pred_region
      %40 = vsyncadd [#allocation7], 0
      %s41 = sshll.u32 %s2, 4
      %s42 = int_to_ptr.hbm [resolvable:$true] %s41
      %s43 = sshll.u32 [#allocation8], 4
      %s44 = int_to_ptr.vmem [resolvable:$true] %s43
      %49 = dma.hbm_to_vmem [thread:$0]  %s42, 4096, %s44, [#allocation7], 128, 128, 8
    $region13: #{tpu_custom_call.1} parent=1 // pred_fallthru
      _
    // Predicated region
    $region14: #{tpu_custom_call.1} parent=1 // pred_check
      _
    $region15: #{tpu_custom_call.1} parent=1 // pred_check_branch
      %51 = sbr.rel (0) target = $region17
    $region16: #{tpu_custom_call.1} parent=1 // pred_region
      %53 = dma.done [#allocation4], 256
    $region17: #{tpu_custom_call.1} parent=1 // pred_fallthru
      _
    // Predicated region
    $region18: #{tpu_custom_call.1} parent=1 // pred_check
      _
    $region19: #{tpu_custom_call.1} parent=1 // pred_check_branch
      %55 = sbr.rel (0) target = $region21
    $region20: #{tpu_custom_call.1} parent=1 // pred_region
      %57 = dma.done [#allocation7], 8192
    $region21: #{tpu_custom_call.1} parent=1 // pred_fallthru
      _
    // Predicated region
    $region22: #{tpu_custom_call.1} parent=1 // pred_check
      _
    $region23: #{tpu_custom_call.1} parent=1 // pred_check_branch
      %59 = sbr.rel (0) target = $region25
    $region24: #{tpu_custom_call.1} parent=1 // pred_region
      %61 = dma.done [#allocation7], 4096
    $region25: #{tpu_custom_call.1} parent=1 // pred_fallthru
      _
    %p62 = scmp.eq.s32.totalorder 0, 0
    // Predicated region
    $region26: #{tpu_custom_call.1} parent=1 // pred_check
      %p63 = pneg %p62
    $region27: #{tpu_custom_call.1} parent=1 // pred_check_branch
      %65 = sbr.rel (%p63) target = $region29
    $region28: #{tpu_custom_call.1} parent=1 // pred_region
      %66 = vst [vmem:[#allocation2] sm:$0xff] 0.0
      %67 = vst [vmem:[#allocation2 + $0x8] sm:$0xff] 0.0
    $region29: #{tpu_custom_call.1} parent=1 // pred_fallthru
      _
    %v68 = vld [vmem:[#allocation3] sm:$0xff]
    %v69 = vld [vmem:[#allocation3 + $0x8] sm:$0xff]
    %v70 = vld [vmem:[#allocation6] sm:$0xff]
    %v71 = vld [vmem:[#allocation6 + $0x8] sm:$0xff]
    %v72 = vld [vmem:[#allocation6 + $0x10] sm:$0xff]
    %v73 = vld [vmem:[#allocation6 + $0x18] sm:$0xff]
    %v74 = vld [vmem:[#allocation6 + $0x20] sm:$0xff]
    %v75 = vld [vmem:[#allocation6 + $0x28] sm:$0xff]
    %v76 = vld [vmem:[#allocation6 + $0x30] sm:$0xff]
    %v77 = vld [vmem:[#allocation6 + $0x38] sm:$0xff]
    %v78 = vld [vmem:[#allocation6 + $0x40] sm:$0xff]
    %v79 = vld [vmem:[#allocation6 + $0x48] sm:$0xff]
    %v80 = vld [vmem:[#allocation6 + $0x50] sm:$0xff]
    %v81 = vld [vmem:[#allocation6 + $0x58] sm:$0xff]
    %v82 = vld [vmem:[#allocation6 + $0x60] sm:$0xff]
    %v83 = vld [vmem:[#allocation6 + $0x68] sm:$0xff]
    %v84 = vld [vmem:[#allocation6 + $0x70] sm:$0xff]
    %v85 = vld [vmem:[#allocation6 + $0x78] sm:$0xff]
    %v86 = vld [vmem:[#allocation6 + $0x80] sm:$0xff]
    %v87 = vld [vmem:[#allocation6 + $0x88] sm:$0xff]
    %v88 = vld [vmem:[#allocation6 + $0x90] sm:$0xff]
    %v89 = vld [vmem:[#allocation6 + $0x98] sm:$0xff]
    %v90 = vld [vmem:[#allocation6 + $0xa0] sm:$0xff]
    %v91 = vld [vmem:[#allocation6 + $0xa8] sm:$0xff]
    %v92 = vld [vmem:[#allocation6 + $0xb0] sm:$0xff]
    %v93 = vld [vmem:[#allocation6 + $0xb8] sm:$0xff]
    %v94 = vld [vmem:[#allocation6 + $0xc0] sm:$0xff]
    %v95 = vld [vmem:[#allocation6 + $0xc8] sm:$0xff]
    %v96 = vld [vmem:[#allocation6 + $0xd0] sm:$0xff]
    %v97 = vld [vmem:[#allocation6 + $0xd8] sm:$0xff]
    %v98 = vld [vmem:[#allocation6 + $0xe0] sm:$0xff]
    %v99 = vld [vmem:[#allocation6 + $0xe8] sm:$0xff]
    %v100 = vld [vmem:[#allocation6 + $0xf0] sm:$0xff]
    %v101 = vld [vmem:[#allocation6 + $0xf8] sm:$0xff]
    %v102 = vld [vmem:[#allocation6 + $0x100] sm:$0xff]
    %v103 = vld [vmem:[#allocation6 + $0x108] sm:$0xff]
    %v104 = vld [vmem:[#allocation6 + $0x110] sm:$0xff]
    %v105 = vld [vmem:[#allocation6 + $0x118] sm:$0xff]
    %v106 = vld [vmem:[#allocation6 + $0x120] sm:$0xff]
    %v107 = vld [vmem:[#allocation6 + $0x128] sm:$0xff]
    %v108 = vld [vmem:[#allocation6 + $0x130] sm:$0xff]
    %v109 = vld [vmem:[#allocation6 + $0x138] sm:$0xff]
    %v110 = vld [vmem:[#allocation6 + $0x140] sm:$0xff]
    %v111 = vld [vmem:[#allocation6 + $0x148] sm:$0xff]
    %v112 = vld [vmem:[#allocation6 + $0x150] sm:$0xff]
    %v113 = vld [vmem:[#allocation6 + $0x158] sm:$0xff]
    %v114 = vld [vmem:[#allocation6 + $0x160] sm:$0xff]
    %v115 = vld [vmem:[#allocation6 + $0x168] sm:$0xff]
    %v116 = vld [vmem:[#allocation6 + $0x170] sm:$0xff]
    %v117 = vld [vmem:[#allocation6 + $0x178] sm:$0xff]
    %v118 = vld [vmem:[#allocation6 + $0x180] sm:$0xff]
    %v119 = vld [vmem:[#allocation6 + $0x188] sm:$0xff]
    %v120 = vld [vmem:[#allocation6 + $0x190] sm:$0xff]
    %v121 = vld [vmem:[#allocation6 + $0x198] sm:$0xff]
    %v122 = vld [vmem:[#allocation6 + $0x1a0] sm:$0xff]
    %v123 = vld [vmem:[#allocation6 + $0x1a8] sm:$0xff]
    %v124 = vld [vmem:[#allocation6 + $0x1b0] sm:$0xff]
    %v125 = vld [vmem:[#allocation6 + $0x1b8] sm:$0xff]
    %v126 = vld [vmem:[#allocation6 + $0x1c0] sm:$0xff]
    %v127 = vld [vmem:[#allocation6 + $0x1c8] sm:$0xff]
    %v128 = vld [vmem:[#allocation6 + $0x1d0] sm:$0xff]
    %v129 = vld [vmem:[#allocation6 + $0x1d8] sm:$0xff]
    %v130 = vld [vmem:[#allocation6 + $0x1e0] sm:$0xff]
    %v131 = vld [vmem:[#allocation6 + $0x1e8] sm:$0xff]
    %v132 = vld [vmem:[#allocation6 + $0x1f0] sm:$0xff]
    %v133 = vld [vmem:[#allocation6 + $0x1f8] sm:$0xff]
    %134 = vmatpush.msra.mxu0 %v130
    %135 = vmatpush.msra.mxu0 %v126
    %136 = vmatpush.msra.mxu0 %v122
    %137 = vmatpush.msra.mxu0 %v118
    %138 = vmatpush.msra.mxu0 %v114
    %139 = vmatpush.msra.mxu0 %v110
    %140 = vmatpush.msra.mxu0 %v106
    %141 = vmatpush.msra.mxu0 %v102
    %142 = vmatpush.msra.mxu0 %v98
    %143 = vmatpush.msra.mxu0 %v94
    %144 = vmatpush.msra.mxu0 %v90
    %145 = vmatpush.msra.mxu0 %v86
    %146 = vmatpush.msra.mxu0 %v82
    %147 = vmatpush.msra.mxu0 %v78
    %148 = vmatpush.msra.mxu0 %v74
    %149 = vmatpush.msra.mxu0 %v70
    %150 = vmatmul.f32.gmra.mxu0 %v68
    %v151 = vpop.f32.mrf.mxu0
    %v152 = vadd.f32 0.0, %v151
    %153 = vmatmul.f32.gmra.mxu0 %v69
    %v154 = vpop.f32.mrf.mxu0
    %v155 = vadd.f32 0.0, %v154
    %156 = vdwg.mxu0
    %157 = vmatpush.msra.mxu0 %v131
    %158 = vmatpush.msra.mxu0 %v127
    %159 = vmatpush.msra.mxu0 %v123
    %160 = vmatpush.msra.mxu0 %v119
    %161 = vmatpush.msra.mxu0 %v115
    %162 = vmatpush.msra.mxu0 %v111
    %163 = vmatpush.msra.mxu0 %v107
    %164 = vmatpush.msra.mxu0 %v103
    %165 = vmatpush.msra.mxu0 %v99
    %166 = vmatpush.msra.mxu0 %v95
    %167 = vmatpush.msra.mxu0 %v91
    %168 = vmatpush.msra.mxu0 %v87
    %169 = vmatpush.msra.mxu0 %v83
    %170 = vmatpush.msra.mxu0 %v79
    %171 = vmatpush.msra.mxu0 %v75
    %172 = vmatpush.msra.mxu0 %v71
    %173 = vmatmul.f32.gmra.mxu0 %v68
    %v174 = vpop.f32.mrf.mxu0
    %v175 = vadd.f32 0.0, %v174
    %176 = vmatmul.f32.gmra.mxu0 %v69
    %v177 = vpop.f32.mrf.mxu0
    %v178 = vadd.f32 0.0, %v177
    %179 = vdwg.mxu0
    %180 = vmatpush.msra.mxu0 %v132
    %181 = vmatpush.msra.mxu0 %v128
    %182 = vmatpush.msra.mxu0 %v124
    %183 = vmatpush.msra.mxu0 %v120
    %184 = vmatpush.msra.mxu0 %v116
    %185 = vmatpush.msra.mxu0 %v112
    %186 = vmatpush.msra.mxu0 %v108
    %187 = vmatpush.msra.mxu0 %v104
    %188 = vmatpush.msra.mxu0 %v100
    %189 = vmatpush.msra.mxu0 %v96
    %190 = vmatpush.msra.mxu0 %v92
    %191 = vmatpush.msra.mxu0 %v88
    %192 = vmatpush.msra.mxu0 %v84
    %193 = vmatpush.msra.mxu0 %v80
    %194 = vmatpush.msra.mxu0 %v76
    %195 = vmatpush.msra.mxu0 %v72
    %196 = vmatmul.f32.gmra.mxu0 %v68
    %v197 = vpop.f32.mrf.mxu0
    %v198 = vadd.f32 0.0, %v197
    %199 = vmatmul.f32.gmra.mxu0 %v69
    %v200 = vpop.f32.mrf.mxu0
    %v201 = vadd.f32 0.0, %v200
    %202 = vdwg.mxu0
    %203 = vmatpush.msra.mxu0 %v133
    %204 = vmatpush.msra.mxu0 %v129
    %205 = vmatpush.msra.mxu0 %v125
    %206 = vmatpush.msra.mxu0 %v121
    %207 = vmatpush.msra.mxu0 %v117
    %208 = vmatpush.msra.mxu0 %v113
    %209 = vmatpush.msra.mxu0 %v109
    %210 = vmatpush.msra.mxu0 %v105
    %211 = vmatpush.msra.mxu0 %v101
    %212 = vmatpush.msra.mxu0 %v97
    %213 = vmatpush.msra.mxu0 %v93
    %214 = vmatpush.msra.mxu0 %v89
    %215 = vmatpush.msra.mxu0 %v85
    %216 = vmatpush.msra.mxu0 %v81
    %217 = vmatpush.msra.mxu0 %v77
    %218 = vmatpush.msra.mxu0 %v73
    %219 = vmatmul.f32.gmra.mxu0 %v68
    %v220 = vpop.f32.mrf.mxu0
    %v221 = vadd.f32 0.0, %v220
    %222 = vmatmul.f32.gmra.mxu0 %v69
    %v223 = vpop.f32.mrf.mxu0
    %v224 = vadd.f32 0.0, %v223
    %225 = vdwg.mxu0
    %v226 = vmul.f32 %v152, %v198
    %v227 = vmul.f32 %v175, %v221
    %v228 = vmul.f32 %v155, %v201
    %v229 = vmul.f32 %v178, %v224
    %v230 = vld [vmem:[#allocation2] sm:$0xff]
    %v231 = vld [vmem:[#allocation2 + $0x8] sm:$0xff]
    %v232 = vld [vmem:[#allocation8] sm:$0xff]
    %v233 = vld [vmem:[#allocation8 + $0x8] sm:$0xff]
    %v234 = vld [vmem:[#allocation8 + $0x10] sm:$0xff]
    %v235 = vld [vmem:[#allocation8 + $0x18] sm:$0xff]
    %v236 = vld [vmem:[#allocation8 + $0x20] sm:$0xff]
    %v237 = vld [vmem:[#allocation8 + $0x28] sm:$0xff]
    %v238 = vld [vmem:[#allocation8 + $0x30] sm:$0xff]
    %v239 = vld [vmem:[#allocation8 + $0x38] sm:$0xff]
    %v240 = vld [vmem:[#allocation8 + $0x40] sm:$0xff]
    %v241 = vld [vmem:[#allocation8 + $0x48] sm:$0xff]
    %v242 = vld [vmem:[#allocation8 + $0x50] sm:$0xff]
    %v243 = vld [vmem:[#allocation8 + $0x58] sm:$0xff]
    %v244 = vld [vmem:[#allocation8 + $0x60] sm:$0xff]
    %v245 = vld [vmem:[#allocation8 + $0x68] sm:$0xff]
    %v246 = vld [vmem:[#allocation8 + $0x70] sm:$0xff]
    %v247 = vld [vmem:[#allocation8 + $0x78] sm:$0xff]
    %v248 = vld [vmem:[#allocation8 + $0x80] sm:$0xff]
    %v249 = vld [vmem:[#allocation8 + $0x88] sm:$0xff]
    %v250 = vld [vmem:[#allocation8 + $0x90] sm:$0xff]
    %v251 = vld [vmem:[#allocation8 + $0x98] sm:$0xff]
    %v252 = vld [vmem:[#allocation8 + $0xa0] sm:$0xff]
    %v253 = vld [vmem:[#allocation8 + $0xa8] sm:$0xff]
    %v254 = vld [vmem:[#allocation8 + $0xb0] sm:$0xff]
    %v255 = vld [vmem:[#allocation8 + $0xb8] sm:$0xff]
    %v256 = vld [vmem:[#allocation8 + $0xc0] sm:$0xff]
    %v257 = vld [vmem:[#allocation8 + $0xc8] sm:$0xff]
    %v258 = vld [vmem:[#allocation8 + $0xd0] sm:$0xff]
    %v259 = vld [vmem:[#allocation8 + $0xd8] sm:$0xff]
    %v260 = vld [vmem:[#allocation8 + $0xe0] sm:$0xff]
    %v261 = vld [vmem:[#allocation8 + $0xe8] sm:$0xff]
    %v262 = vld [vmem:[#allocation8 + $0xf0] sm:$0xff]
    %v263 = vld [vmem:[#allocation8 + $0xf8] sm:$0xff]
    %264 = vmatpush.msra.mxu0 %v247
    %265 = vmatpush.msra.mxu0 %v246
    %266 = vmatpush.msra.mxu0 %v245
    %267 = vmatpush.msra.mxu0 %v244
    %268 = vmatpush.msra.mxu0 %v243
    %269 = vmatpush.msra.mxu0 %v242
    %270 = vmatpush.msra.mxu0 %v241
    %271 = vmatpush.msra.mxu0 %v240
    %272 = vmatpush.msra.mxu0 %v239
    %273 = vmatpush.msra.mxu0 %v238
    %274 = vmatpush.msra.mxu0 %v237
    %275 = vmatpush.msra.mxu0 %v236
    %276 = vmatpush.msra.mxu0 %v235
    %277 = vmatpush.msra.mxu0 %v234
    %278 = vmatpush.msra.mxu0 %v233
    %279 = vmatpush.msra.mxu0 %v232
    %280 = vmatmul.f32.gmra.mxu0 %v226
    %v281 = vpop.f32.mrf.mxu0
    %v282 = vadd.f32 0.0, %v281
    %283 = vmatmul.f32.gmra.mxu0 %v228
    %v284 = vpop.f32.mrf.mxu0
    %v285 = vadd.f32 0.0, %v284
    %286 = vdwg.mxu0
    %287 = vmatpush.msra.mxu0 %v263
    %288 = vmatpush.msra.mxu0 %v262
    %289 = vmatpush.msra.mxu0 %v261
    %290 = vmatpush.msra.mxu0 %v260
    %291 = vmatpush.msra.mxu0 %v259
    %292 = vmatpush.msra.mxu0 %v258
    %293 = vmatpush.msra.mxu0 %v257
    %294 = vmatpush.msra.mxu0 %v256
    %295 = vmatpush.msra.mxu0 %v255
    %296 = vmatpush.msra.mxu0 %v254
    %297 = vmatpush.msra.mxu0 %v253
    %298 = vmatpush.msra.mxu0 %v252
    %299 = vmatpush.msra.mxu0 %v251
    %300 = vmatpush.msra.mxu0 %v250
    %301 = vmatpush.msra.mxu0 %v249
    %302 = vmatpush.msra.mxu0 %v248
    %303 = vmatmul.f32.gmra.mxu0 %v227
    %v304 = vpop.f32.mrf.mxu0
    %v305 = vadd.f32 %v282, %v304
    %306 = vmatmul.f32.gmra.mxu0 %v229
    %v307 = vpop.f32.mrf.mxu0
    %v308 = vadd.f32 %v285, %v307
    %309 = vdwg.mxu0
    %v310 = vadd.f32 %v230, %v305
    %v311 = vadd.f32 %v231, %v308
    %312 = vst [vmem:[#allocation2] sm:$0xff] %v310
    %313 = vst [vmem:[#allocation2 + $0x8] sm:$0xff] %v311
    // Predicated region
    $region30: #{tpu_custom_call.1} parent=1 // pred_check
      %p314 = pneg %p62
    $region31: #{tpu_custom_call.1} parent=1 // pred_check_branch
      %316 = sbr.rel (%p314) target = $region33
    $region32: #{tpu_custom_call.1} parent=1 // pred_region
      %v317 = vld [vmem:[#allocation2] sm:$0xff]
      %v318 = vld [vmem:[#allocation2 + $0x8] sm:$0xff]
      %319 = vst [vmem:[#allocation9] sm:$0xff] %v317
      %320 = vst [vmem:[#allocation9 + $0x8] sm:$0xff] %v318
    $region33: #{tpu_custom_call.1} parent=1 // pred_fallthru
      _
    // Predicated region
    $region34: #{tpu_custom_call.1} parent=1 // pred_check
      _
    $region35: #{tpu_custom_call.1} parent=1 // pred_check_branch
      %322 = sbr.rel (0) target = $region37
    $region36: #{tpu_custom_call.1} parent=1 // pred_region
      %324 = vsyncadd [#allocation5], 0
      %s325 = sshll.u32 [#allocation9], 4
      %s326 = int_to_ptr.vmem [resolvable:$true] %s325
      %s327 = sshll.u32 %s3, 4
      %s328 = int_to_ptr.hbm [resolvable:$true] %s327
      %333 = dma.vmem_to_hbm [thread:$0]  %s326, 256, %s328, [#allocation5], 128, 128, 8
    $region37: #{tpu_custom_call.1} parent=1 // pred_fallthru
      _
    // Predicated region
    $region38: #{tpu_custom_call.1} parent=1 // pred_check
      _
    $region39: #{tpu_custom_call.1} parent=1 // pred_check_branch
      %335 = sbr.rel (0) target = $region41
    $region40: #{tpu_custom_call.1} parent=1 // pred_region
      %337 = dma.done [#allocation5], 256
    $region41: #{tpu_custom_call.1} parent=1 // pred_fallthru
      _
    %338 = vsyncpa [#allocation4], 1
    %339 = vsyncpa [#allocation7], 1
    %340 = vsyncpa [#allocation5], 1

</llo_original>
